<compile_context>
chip_gen: v7x
topology: tpu7x:2x2x1
jax: 0.10.0
libtpu: 0.0.40
codegen_flags: <defaults>
</compile_context>

<pallas_src>
import jax
import jax.numpy as jnp
from jax.experimental import pallas as pl
from jax.experimental.pallas import tpu as pltpu


# Zero-cost hint: the aliased identity moves no bytes and does no math.
_ZERO_COST = pl.CostEstimate(flops=0, transcendentals=0, bytes_accessed=0)


# ---------------------------------------------------------------------------
# Production path: no Pallas kernel at all.
# ---------------------------------------------------------------------------
def global_model_forward(x, edge_index, edge_attr, u, batch):
    """GlobalModel.forward == nn.Identity(u).

    Strictly dominant on v5e/v6e/v7x: no kernel launch, no HBM<->VMEM DMA,
    and XLA keeps full fusion freedom around whatever produces/consumes `u`.
    """
    del x, edge_index, edge_attr, batch
    return u


# ---------------------------------------------------------------------------
# Optional explicit Pallas op boundary (fusion/profiling anchor).
# ---------------------------------------------------------------------------
def _identity_touch_kernel(u_hbm_ref, out_hbm_ref):
    # Output aliases the input buffer; nothing to compute or DMA. `touch`
    # just pins a dependence on the aliased output ref so the call survives.
    del u_hbm_ref
    pltpu.touch(out_hbm_ref)


def _identity_empty_kernel(u_hbm_ref, out_hbm_ref):
    # Trivially empty body; the pallas_call is kept alive via
    # has_side_effects=True and the output aliases the input.
    del u_hbm_ref, out_hbm_ref


def _identity_copy_kernel(u_ref, out_ref):
    out_ref[...] = u_ref[...]


def _alias_noop_call(kernel, u, **extra_kwargs):
    """Zero-traffic identity: pl.ANY refs + input/output aliasing + no-op body."""
    return pl.pallas_call(
        kernel,
        out_shape=jax.ShapeDtypeStruct(u.shape, u.dtype),
        in_specs=[pl.BlockSpec(memory_space=pl.ANY)],
        out_specs=pl.BlockSpec(memory_space=pl.ANY),
        input_output_aliases={0: 0},
        cost_estimate=_ZERO_COST,
        **extra_kwargs,
    )(u)


def _vmem_copy_call(u):
    """Last-resort fallback: single whole-array VMEM copy (no grid).

    Only used if the aliased no-op variants fail to lower. The block is the
    full array, so the (8,128) divisibility constraint does not apply even
    for small / non-multiple-of-128 emb_dim.
    """
    return pl.pallas_call(
        _identity_copy_kernel,
        out_shape=jax.ShapeDtypeStruct(u.shape, u.dtype),
        cost_estimate=pl.CostEstimate(
            flops=0,
            transcendentals=0,
            bytes_accessed=2 * u.size * u.dtype.itemsize,
        ),
    )(u)


def global_model_forward_pallas(x, edge_index, edge_attr, u, batch):
    """Identity on `u` as an explicit Pallas op boundary.

    Not intended as the hot production path (use `global_model_forward`).
    For true zero-traffic behavior the caller must donate `u` (or drop all
    other uses of it); otherwise XLA inserts a defensive copy before the
    aliased custom call.
    """
    del x, edge_index, edge_attr, batch
    # Degenerate shapes (num_graphs == 0 or emb_dim == 0): nothing to do.
    if u.size == 0:
        return u

    # Preferred: aliased no-op pinned by pltpu.touch.
    try:
        return _alias_noop_call(_identity_touch_kernel, u)
    except Exception:
        pass
    # Fallback 1: aliased, trivially-empty body kept alive via side effects.
    try:
        return _alias_noop_call(
            _identity_empty_kernel,
            u,
            compiler_params=pltpu.CompilerParams(has_side_effects=True),
        )
    except Exception:
        pass
    # Fallback 2: guaranteed-to-lower whole-array VMEM copy.
    return _vmem_copy_call(u)


if __name__ == "__main__":
    key = jax.random.PRNGKey(0)
    k_x, k_ea, k_u = jax.random.split(key, 3)

    # Small synthetic graph-batch consistent with the forward signature.
    num_nodes = 16
    num_edges = 24
    node_feat = 8
    edge_feat = 4
    num_graphs = 2
    emb_dim = 32

    x = jax.random.normal(k_x, (num_nodes, node_feat), dtype=jnp.float32)
    edge_index = jnp.stack(
        [jnp.arange(num_edges, dtype=jnp.int32) % num_nodes,
         (jnp.arange(num_edges, dtype=jnp.int32) + 1) % num_nodes],
        axis=0,
    )  # [2, num_edges]
    edge_attr = jax.random.normal(k_ea, (num_edges, edge_feat), dtype=jnp.float32)
    u = jax.random.normal(k_u, (num_graphs, emb_dim), dtype=jnp.float32)
    batch = (jnp.arange(num_nodes, dtype=jnp.int32) * num_graphs) // num_nodes

    # Primary (kernel-free) path — what production code should use.
    out_direct = jax.block_until_ready(
        global_model_forward(x, edge_index, edge_attr, u, batch))

    # Explicit op-boundary path — aliased no-op Pallas kernel.
    out_pallas = jax.block_until_ready(
        global_model_forward_pallas(x, edge_index, edge_attr, u, batch))

    # Verify identity semantics against the reference (out == u), bit exact.
    assert out_direct.shape == u.shape and out_direct.dtype == u.dtype
    assert bool(jnp.all(out_direct == u))
    assert out_pallas.shape == u.shape and out_pallas.dtype == u.dtype
    assert bool(jnp.all(out_pallas == u))

    print("KERNEL_OK")
</pallas_src>

<mosaic_0001>
module attributes {stable_mosaic.version = 11 : i64} {
  func.func @_identity_touch_kernel(%arg0: memref<2x32xf32, #tpu.memory_space<any>>, %arg1: memref<2x32xf32, #tpu.memory_space<any>>) attributes {dimension_semantics = [], scalar_prefetch = 0 : i64, scratch_operands = 0 : i64, tpu.core_type = #tpu.core_type<tc>} {
    return
  }
}

module attributes {stable_mosaic.version = 11 : i64} {
  func.func @_identity_empty_kernel(%arg0: memref<2x32xf32, #tpu.memory_space<any>>, %arg1: memref<2x32xf32, #tpu.memory_space<any>>) attributes {dimension_semantics = [], scalar_prefetch = 0 : i64, scratch_operands = 0 : i64, tpu.core_type = #tpu.core_type<tc>} {
    return
  }
}

module attributes {stable_mosaic.version = 11 : i64} {
  func.func @_identity_copy_kernel(%arg0: memref<2x32xf32, #tpu.memory_space<vmem>>, %arg1: memref<2x32xf32, #tpu.memory_space<vmem>>) attributes {dimension_semantics = [], scalar_prefetch = 0 : i64, scratch_operands = 0 : i64, tpu.core_type = #tpu.core_type<tc>} {
    %c0 = arith.constant 0 : index
    %c0_0 = arith.constant 0 : index
    %0 = vector.load %arg0[%c0, %c0_0] : memref<2x32xf32, #tpu.memory_space<vmem>>, vector<2x32xf32>
    %c0_1 = arith.constant 0 : index
    %c0_2 = arith.constant 0 : index
    %1 = vector.load %arg1[%c0_1, %c0_2] : memref<2x32xf32, #tpu.memory_space<vmem>>, vector<2x32xf32>
    tpu.vector_store %arg1[%c0_1, %c0_2], %0 {strides = array<i32>} : memref<2x32xf32, #tpu.memory_space<vmem>>, vector<2x32xf32>,
    return
  }
}

</mosaic_0001>

<llo_original>
// kernel: tpu_custom_call.1
$region0: #{tpu_custom_call.1}
  #allocation0 [shape = 'u32[]', space=smem, size = 0x4, offset = 0x4, fixed_abs, tag = 'smem constant byte address 0x4 - core index']
  #allocation1 [shape = 'u32[144,128]{1,0:T(1,128)}', space=vmem, size = 0x12000, scoped, tag = 'internal scratch']
  %s0 = inlined_call_operand.hbm [shape: f32[2,32], index: 0, kind: input, shape index: {}, may-alias: {0,1}]
  %s1 = inlined_call_operand.hbm [shape: f32[2,32], index: 1, kind: output, shape index: {}, may-alias: {0,1}]
  %s2 = sld [smem:[#allocation0]]
  $region2: #{tpu_custom_call.1} parent=0
    _
  %s4 = ssub.s32 1, %s2
  %s5 = scalar_select 0, %s4, %s2

// kernel: tpu_custom_call.1
$region0: #{tpu_custom_call.1}
  #allocation0 [shape = 'u32[]', space=smem, size = 0x4, offset = 0x4, fixed_abs, tag = 'smem constant byte address 0x4 - core index']
  #allocation1 [shape = 'u32[144,128]{1,0:T(1,128)}', space=vmem, size = 0x12000, scoped, tag = 'internal scratch']
  %s0 = inlined_call_operand.hbm [shape: f32[2,32], index: 0, kind: input, shape index: {}, may-alias: {0,1}]
  %s1 = inlined_call_operand.hbm [shape: f32[2,32], index: 1, kind: output, shape index: {}, may-alias: {0,1}]
  %s2 = sld [smem:[#allocation0]]
  $region2: #{tpu_custom_call.1} parent=0
    _
  %s4 = ssub.s32 1, %s2
  %s5 = scalar_select 0, %s4, %s2

// kernel: tpu_custom_call.1
$region0: #{tpu_custom_call.1}
  #allocation0 [shape = 'u32[]', space=smem, size = 0x4, offset = 0x4, fixed_abs, tag = 'smem constant byte address 0x4 - core index']
  #allocation1 [shape = 'u32[144,128]{1,0:T(1,128)}', space=vmem, size = 0x12000, scoped, tag = 'internal scratch']
  %s0 = inlined_call_operand.hbm [shape: f32[2,32], index: 0, kind: input, shape index: {}]
  %s1 = inlined_call_operand.hbm [shape: f32[2,32], index: 1, kind: output, shape index: {}]
  %s2 = sld [smem:[#allocation0]]
  $region18: #{tpu_custom_call.1} parent=0
    _
  %s4 = ssub.s32 1, %s2
  %s5 = scalar_select 0, %s4, %s2
  $region1: #{tpu_custom_call.1} parent=0
    #allocation2 [shape = 'u8[1024]{0}', space=vmem, size = 0x400, scoped, tag = 'input window, operand 0, single buffered']
    #allocation3 [shape = 's32[1]{0}', space=sflag, size = 0x4, scoped, tag = 'scoped memory for tpu_custom_call.1']
    #allocation4 [shape = 's32[1]{0}', space=sflag, size = 0x4, scoped, tag = 'scoped memory for tpu_custom_call.1']
    #allocation5 [shape = 'u8[1024]{0}', space=vmem, size = 0x400, scoped, tag = 'output window, operand 0, single buffered']
    %6 = vsyncpa [#allocation3], 0
    %7 = vsyncpa [#allocation4], 0
    // Predicated region
    $region2: #{tpu_custom_call.1} parent=1 // pred_check
      _
    $region3: #{tpu_custom_call.1} parent=1 // pred_check_branch
      %9 = sbr.rel (0) target = $region5
    $region4: #{tpu_custom_call.1} parent=1 // pred_region
      %s11 = ssub.s32 32, 32
      %12 = vsyncadd [#allocation3], %s11
      %s14 = sshll.u32 [#allocation2], 4
      %s15 = int_to_ptr.vmem [resolvable:$true] %s14
      %17 = dma.hbm_to_vmem [thread:$0]  %s0, 32, %s15, [#allocation3]
    $region5: #{tpu_custom_call.1} parent=1 // pred_fallthru
      _
    // Predicated region
    $region6: #{tpu_custom_call.1} parent=1 // pred_check
      _
    $region7: #{tpu_custom_call.1} parent=1 // pred_check_branch
      %19 = sbr.rel (0) target = $region9
    $region8: #{tpu_custom_call.1} parent=1 // pred_region
      %20 = dma.done [#allocation3], 32
    $region9: #{tpu_custom_call.1} parent=1 // pred_fallthru
      _
    %v21 = vld [vmem:[#allocation2] sm:$0x3]
    %vm22 = vcmask 254976
    %23 = vst.msk [vmem:[#allocation5] sm:$0x3] %vm22, %v21
    // Predicated region
    $region10: #{tpu_custom_call.1} parent=1 // pred_check
      _
    $region11: #{tpu_custom_call.1} parent=1 // pred_check_branch
      %25 = sbr.rel (0) target = $region13
    $region12: #{tpu_custom_call.1} parent=1 // pred_region
      %s27 = ssub.s32 32, 32
      %28 = vsyncadd [#allocation4], %s27
      %s30 = sshll.u32 [#allocation5], 4
      %s31 = int_to_ptr.vmem [resolvable:$true] %s30
      %33 = dma.vmem_to_hbm [thread:$0]  %s31, 32, %s1, [#allocation4]
    $region13: #{tpu_custom_call.1} parent=1 // pred_fallthru
      _
    // Predicated region
    $region14: #{tpu_custom_call.1} parent=1 // pred_check
      _
    $region15: #{tpu_custom_call.1} parent=1 // pred_check_branch
      %35 = sbr.rel (0) target = $region17
    $region16: #{tpu_custom_call.1} parent=1 // pred_region
      %36 = dma.done [#allocation4], 32
    $region17: #{tpu_custom_call.1} parent=1 // pred_fallthru
      _
    %37 = vsyncpa [#allocation3], 1
    %38 = vsyncpa [#allocation4], 1

</llo_original>
